<compile_context>
chip_gen: v6e
topology: v6e:2x2x1
jax: 0.10.0
libtpu: 0.0.40
codegen_flags: <defaults>
</compile_context>

<pallas_src>
import functools
from itertools import product
from math import lgamma, exp, log

import numpy as np
import jax
import jax.numpy as jnp
from jax.experimental import pallas as pl
from jax.experimental.pallas import tpu as pltpu

F32_EPS = float(np.finfo(np.float32).eps)  # matches torch probs_to_logits clamp eps


# ----------------------------------------------------------------------------
# Pallas kernel: the entire forward pass for one batch of inputs.
# ----------------------------------------------------------------------------
def vae_kernel(x_ref, u_ref, p_ref, out_ref, *, tau, layout, n_enc, n_dec):
    def par(name):
        off, r, c = layout[name]           # static Python ints -> free static slices
        return p_ref[off:off + r, :c]

    # ---- encoder MLP: Linear -> ReLU (x hidden_amount) -> Linear ----
    h = x_ref[...]
    for i in range(n_enc - 1):
        h = jnp.maximum(
            jnp.dot(h, par(f"ew{i}"), preferred_element_type=jnp.float32) + par(f"eb{i}"), 0.0)
    enc = jnp.dot(h, par(f"ew{n_enc - 1}"), preferred_element_type=jnp.float32) + par(f"eb{n_enc - 1}")

    # log-softmax directly (replaces softmax -> clamp -> log round trip)
    s = enc - jnp.max(enc, axis=-1, keepdims=True)
    logp = s - jnp.log(jnp.sum(jnp.exp(s), axis=-1, keepdims=True))               # (B, L)

    # ---- multinomial pmf over count vectors + noise channel ----
    # prod(probs**cv) == exp(cv @ log(probs)); multinomial coeffs are folded into
    # the transition matrix host-side, so one matmul gives the noised pmf.
    log_pow = jnp.dot(logp, par("cvt"), preferred_element_type=jnp.float32)        # (B, K)
    noised = jnp.dot(jnp.exp(log_pow), par("pmat"), preferred_element_type=jnp.float32)  # (B, K)
    logits = jnp.log(jnp.clip(noised, F32_EPS, 1.0 - F32_EPS))                     # probs_to_logits

    # ---- Gumbel-softmax reparameterization (uniforms supplied as operand) ----
    gumbel = -jnp.log(-jnp.log(u_ref[...]))
    yl = (logits + gumbel) * (1.0 / tau)
    e2 = jnp.exp(yl - jnp.max(yl, axis=-1, keepdims=True))
    z = e2 * (1.0 / jnp.sum(e2, axis=-1, keepdims=True))                           # (B, K)

    # ---- mean latent counts (1/n folded into cv) + decoder MLP ----
    h = jnp.dot(z, par("cvm"), preferred_element_type=jnp.float32)                 # (B, L)
    for i in range(n_dec - 1):
        h = jnp.maximum(
            jnp.dot(h, par(f"dw{i}"), preferred_element_type=jnp.float32) + par(f"db{i}"), 0.0)
    # final decoder layer is padded host-side to a lane-dense (multiple-of-128) width
    out_ref[...] = (jnp.dot(h, par(f"dw{n_dec - 1}"), preferred_element_type=jnp.float32)
                    + par(f"db{n_dec - 1}"))


# ----------------------------------------------------------------------------
# Host-side parameter packing (one VMEM operand, 8-row-aligned slots)
# ----------------------------------------------------------------------------
def _pack_params(named, width):
    layout, blocks, off = {}, [], 0
    for name, t in named:
        t = jnp.asarray(t, jnp.float32)
        r, c = t.shape
        rp = -(-r // 8) * 8
        blk = jnp.zeros((rp, width), jnp.float32).at[:r, :c].set(t)
        layout[name] = (off, r, c)
        blocks.append(blk)
        off += rp
    return jnp.concatenate(blocks, axis=0), layout


# ----------------------------------------------------------------------------
# Wrapper
# ----------------------------------------------------------------------------
def noised_multinomial_vae_forward(x, key, enc_layers, dec_layers,
                                   count_vectors, multinomial_coeffs, probability_matrix,
                                   *, tau, n_trials):
    x = jnp.asarray(x, jnp.float32)
    B, input_dim = x.shape
    cv = jnp.asarray(count_vectors, jnp.float32)                # (K, L)
    K, L = cv.shape
    coeff = jnp.asarray(multinomial_coeffs, jnp.float32)        # (K,)
    P = jnp.asarray(probability_matrix, jnp.float32)            # (K, K)

    out_pad = -(-input_dim // 128) * 128

    # Exact host-side constant folding (same math, fewer in-kernel ops/operands)
    pmat_scaled = coeff[:, None] * P            # coeffs folded into transition matrix
    cv_mean = cv / float(n_trials)              # 1/n folded into count-vector projection
    cvt = cv.T                                  # (L, K)

    # Pad final decoder layer columns to out_pad so the output store is lane-dense.
    dwL, dbL = dec_layers[-1]
    dwL = jnp.zeros((dwL.shape[0], out_pad), jnp.float32).at[:, :input_dim].set(dwL)
    dbL = jnp.zeros((1, out_pad), jnp.float32).at[:, :input_dim].set(dbL)
    dec_layers = list(dec_layers[:-1]) + [(dwL, dbL)]

    named = []
    for i, (w, b) in enumerate(enc_layers):
        named += [(f"ew{i}", w), (f"eb{i}", b)]
    named += [("cvt", cvt), ("pmat", pmat_scaled), ("cvm", cv_mean)]
    for i, (w, b) in enumerate(dec_layers):
        named += [(f"dw{i}", w), (f"db{i}", b)]

    pack_w = -(-max(int(t.shape[1]) for _, t in named) // 128) * 128
    packed, layout = _pack_params(named, pack_w)

    # torch.rand_like equivalent; drawn host-side (pltpu.prng_* lacks interpret lowering).
    u = jax.random.uniform(key, (B, K), jnp.float32, minval=1e-7, maxval=1.0 - 1e-7)

    hidden = int(enc_layers[0][0].shape[1])
    n_enc, n_dec = len(enc_layers), len(dec_layers)
    flops = 2 * B * (input_dim * hidden + max(n_enc - 2, 0) * hidden * hidden + hidden * L
                     + L * K + K * K + K * L
                     + L * hidden + max(n_dec - 2, 0) * hidden * hidden + hidden * out_pad)
    transcendentals = B * (2 * L + 5 * K)
    bytes_accessed = 4 * (x.size + u.size + packed.size + B * out_pad)

    kernel = functools.partial(vae_kernel, tau=float(tau), layout=layout,
                               n_enc=n_enc, n_dec=n_dec)
    out = pl.pallas_call(
        kernel,
        out_shape=jax.ShapeDtypeStruct((B, out_pad), jnp.float32),
        in_specs=[pl.BlockSpec(memory_space=pltpu.MemorySpace.VMEM)] * 3,
        out_specs=pl.BlockSpec(memory_space=pltpu.MemorySpace.VMEM),
        cost_estimate=pl.CostEstimate(flops=int(flops),
                                      transcendentals=int(transcendentals),
                                      bytes_accessed=int(bytes_accessed)),
    )(x, u, packed)
    return out[:, :input_dim]


# ----------------------------------------------------------------------------
# Deterministic parameter construction + multinomial bookkeeping
# ----------------------------------------------------------------------------
def make_linear(key, fan_in, fan_out):
    kw, kb = jax.random.split(key)
    bound = 1.0 / np.sqrt(fan_in)
    w = jax.random.uniform(kw, (fan_in, fan_out), jnp.float32, -bound, bound)  # stored as W.T (in, out)
    b = jax.random.uniform(kb, (1, fan_out), jnp.float32, -bound, bound)
    return w, b


def build_mlp_layers(key, start, hidden, hidden_amount, end):
    # mirrors _build_layers: Linear(start,h), [Linear(h,h)]*(hidden_amount-1), Linear(h,end)
    sizes = [(start, hidden)] + [(hidden, hidden)] * (hidden_amount - 1) + [(hidden, end)]
    layers = []
    for fi, fo in sizes:
        key, sub = jax.random.split(key)
        layers.append(make_linear(sub, fi, fo))
    return layers


def _multinomial_pmf(counts, p):
    n = sum(counts)
    logc = lgamma(n + 1) - sum(lgamma(c + 1) for c in counts)
    logp = sum(c * log(pi) for c, pi in zip(counts, p) if c > 0)
    return exp(logc + logp)


def compute_probability_matrix(count_vectors_list, noise_matrix, n_trials):
    # Exact transition probability between count vectors under per-trial category
    # noise (dictionary convolution of independent per-category multinomials).
    L = len(noise_matrix)
    K = len(count_vectors_list)
    idx = {tuple(cv): k for k, cv in enumerate(count_vectors_list)}
    P = np.zeros((K, K), dtype=np.float64)
    for src_k, src in enumerate(count_vectors_list):
        dist = {tuple([0] * L): 1.0}
        for i in range(L):
            ci = src[i]
            subs = [list(c) for c in product(range(ci + 1), repeat=L) if sum(c) == ci]
            new_dist = {}
            for vec, pr in dist.items():
                for s in subs:
                    ps = _multinomial_pmf(s, noise_matrix[i])
                    key = tuple(v + sv for v, sv in zip(vec, s))
                    new_dist[key] = new_dist.get(key, 0.0) + pr * ps
            dist = new_dist
        for tgt, pr in dist.items():
            P[src_k, idx[tgt]] = pr
    return P


if __name__ == "__main__":
    # small, module-consistent shapes
    batch = 8
    input_dim = 16
    hidden_dim = 32
    hidden_amount = 2
    latent_dim = 3
    n_trials = 4
    tau = 0.5

    # deterministic row-stochastic noise matrix (latent_dim x latent_dim)
    noise_matrix = (0.85 * np.eye(latent_dim) +
                    (0.15 / (latent_dim - 1)) * (1.0 - np.eye(latent_dim))).tolist()

    # count vectors / coefficients / transition matrix (same ordering as itertools.product)
    count_vectors_list = [list(c) for c in product(range(n_trials + 1), repeat=latent_dim)
                          if sum(c) == n_trials]
    cv_np = np.asarray(count_vectors_list, dtype=np.float32)                      # (K, L)
    coeffs_np = np.exp(lgamma(n_trials + 1) -
                       np.sum([[lgamma(c + 1) for c in row] for row in count_vectors_list], axis=-1)
                       ).astype(np.float32)                                       # (K,)
    pmat_np = compute_probability_matrix(count_vectors_list, noise_matrix, n_trials).astype(np.float32)

    # deterministic parameters + inputs
    root = jax.random.PRNGKey(0)
    k_enc, k_dec, k_x, k_u = jax.random.split(root, 4)
    enc_layers = build_mlp_layers(k_enc, input_dim, hidden_dim, hidden_amount, latent_dim)
    dec_layers = build_mlp_layers(k_dec, latent_dim, hidden_dim, hidden_amount, input_dim)
    x = jax.random.normal(k_x, (batch, input_dim), jnp.float32)

    out = noised_multinomial_vae_forward(
        x, k_u, enc_layers, dec_layers,
        count_vectors=jnp.asarray(cv_np),
        multinomial_coeffs=jnp.asarray(coeffs_np),
        probability_matrix=jnp.asarray(pmat_np),
        tau=tau, n_trials=n_trials)
    out = jax.block_until_ready(out)

    assert out.shape == (batch, input_dim)
    assert bool(jnp.all(jnp.isfinite(out)))
    print("KERNEL_OK")
</pallas_src>

<mosaic_0001>
module attributes {stable_mosaic.version = 11 : i64} {
  func.func @vae_kernel(%arg0: memref<8x16xf32, #tpu.memory_space<vmem>>, %arg1: memref<8x15xf32, #tpu.memory_space<vmem>>, %arg2: memref<240x128xf32, #tpu.memory_space<vmem>>, %arg3: memref<8x128xf32, #tpu.memory_space<vmem>>) attributes {dimension_semantics = [], scalar_prefetch = 0 : i64, scratch_operands = 0 : i64, tpu.core_type = #tpu.core_type<tc>} {
    %c0 = arith.constant 0 : index
    %c0_0 = arith.constant 0 : index
    %0 = vector.load %arg0[%c0, %c0_0] : memref<8x16xf32, #tpu.memory_space<vmem>>, vector<8x16xf32>
    %c0_1 = arith.constant 0 : index
    %c0_2 = arith.constant 0 : index
    %1 = vector.load %arg2[%c0_1, %c0_2] : memref<240x128xf32, #tpu.memory_space<vmem>>, vector<16x32xf32>
    %cst = arith.constant dense<0.000000e+00> : vector<8x32xf32>
    %2 = tpu.matmul %0, %1, %cst {dimension_numbers = #tpu.dot_dimension_numbers<[1], [0], [0], [1], [0, 0, 1, 1], [], []>} : vector<8x16xf32>, vector<16x32xf32>, vector<8x32xf32> -> vector<8x32xf32>
    %c16 = arith.constant 16 : index
    %c0_3 = arith.constant 0 : index
    %3 = vector.load %arg2[%c16, %c0_3] : memref<240x128xf32, #tpu.memory_space<vmem>>, vector<1x32xf32>
    %4 = vector.broadcast %3 : vector<1x32xf32> to vector<8x32xf32>
    %5 = arith.addf %2, %4 : vector<8x32xf32>
    %cst_4 = arith.constant 0.000000e+00 : f32
    %6 = vector.broadcast %cst_4 : f32 to vector<8x32xf32>
    %7 = arith.maximumf %5, %6 : vector<8x32xf32>
    %c24 = arith.constant 24 : index
    %c0_5 = arith.constant 0 : index
    %8 = vector.load %arg2[%c24, %c0_5] : memref<240x128xf32, #tpu.memory_space<vmem>>, vector<32x32xf32>
    %cst_6 = arith.constant dense<0.000000e+00> : vector<8x32xf32>
    %9 = tpu.matmul %7, %8, %cst_6 {dimension_numbers = #tpu.dot_dimension_numbers<[1], [0], [0], [1], [0, 0, 1, 1], [], []>} : vector<8x32xf32>, vector<32x32xf32>, vector<8x32xf32> -> vector<8x32xf32>
    %c56 = arith.constant 56 : index
    %c0_7 = arith.constant 0 : index
    %10 = vector.load %arg2[%c56, %c0_7] : memref<240x128xf32, #tpu.memory_space<vmem>>, vector<1x32xf32>
    %11 = vector.broadcast %10 : vector<1x32xf32> to vector<8x32xf32>
    %12 = arith.addf %9, %11 : vector<8x32xf32>
    %cst_8 = arith.constant 0.000000e+00 : f32
    %13 = vector.broadcast %cst_8 : f32 to vector<8x32xf32>
    %14 = arith.maximumf %12, %13 : vector<8x32xf32>
    %c64 = arith.constant 64 : index
    %c0_9 = arith.constant 0 : index
    %15 = vector.load %arg2[%c64, %c0_9] : memref<240x128xf32, #tpu.memory_space<vmem>>, vector<32x3xf32>
    %cst_10 = arith.constant dense<0.000000e+00> : vector<8x3xf32>
    %16 = tpu.matmul %14, %15, %cst_10 {dimension_numbers = #tpu.dot_dimension_numbers<[1], [0], [0], [1], [0, 0, 1, 1], [], []>} : vector<8x32xf32>, vector<32x3xf32>, vector<8x3xf32> -> vector<8x3xf32>
    %c96 = arith.constant 96 : index
    %c0_11 = arith.constant 0 : index
    %17 = vector.load %arg2[%c96, %c0_11] : memref<240x128xf32, #tpu.memory_space<vmem>>, vector<1x3xf32>
    %18 = vector.broadcast %17 : vector<1x3xf32> to vector<8x3xf32>
    %19 = arith.addf %16, %18 : vector<8x3xf32>
    %cst_12 = arith.constant dense<0xFF800000> : vector<8xf32>
    %20 = vector.multi_reduction <maximumf>, %19, %cst_12 [1] : vector<8x3xf32> to vector<8xf32>
    %21 = vector.shape_cast %20 : vector<8xf32> to vector<8x1xf32>
    %22 = vector.broadcast %21 : vector<8x1xf32> to vector<8x3xf32>
    %23 = arith.subf %19, %22 : vector<8x3xf32>
    %24 = math.exp %23 : vector<8x3xf32>
    %cst_13 = arith.constant dense<0.000000e+00> : vector<8xf32>
    %25 = vector.multi_reduction <add>, %24, %cst_13 [1] : vector<8x3xf32> to vector<8xf32>
    %26 = vector.shape_cast %25 : vector<8xf32> to vector<8x1xf32>
    %27 = math.log %26 : vector<8x1xf32>
    %28 = vector.broadcast %27 : vector<8x1xf32> to vector<8x3xf32>
    %29 = arith.subf %23, %28 : vector<8x3xf32>
    %c104 = arith.constant 104 : index
    %c0_14 = arith.constant 0 : index
    %30 = vector.load %arg2[%c104, %c0_14] : memref<240x128xf32, #tpu.memory_space<vmem>>, vector<3x15xf32>
    %cst_15 = arith.constant dense<0.000000e+00> : vector<8x15xf32>
    %31 = tpu.matmul %29, %30, %cst_15 {dimension_numbers = #tpu.dot_dimension_numbers<[1], [0], [0], [1], [0, 0, 1, 1], [], []>} : vector<8x3xf32>, vector<3x15xf32>, vector<8x15xf32> -> vector<8x15xf32>
    %32 = math.exp %31 : vector<8x15xf32>
    %c112 = arith.constant 112 : index
    %c0_16 = arith.constant 0 : index
    %33 = vector.load %arg2[%c112, %c0_16] : memref<240x128xf32, #tpu.memory_space<vmem>>, vector<15x15xf32>
    %cst_17 = arith.constant dense<0.000000e+00> : vector<8x15xf32>
    %34 = tpu.matmul %32, %33, %cst_17 {dimension_numbers = #tpu.dot_dimension_numbers<[1], [0], [0], [1], [0, 0, 1, 1], [], []>} : vector<8x15xf32>, vector<15x15xf32>, vector<8x15xf32> -> vector<8x15xf32>
    %cst_18 = arith.constant 1.1920929E-7 : f32
    %cst_19 = arith.constant 0.99999988 : f32
    %35 = vector.broadcast %cst_18 : f32 to vector<8x15xf32>
    %36 = arith.maximumf %35, %34 : vector<8x15xf32>
    %37 = vector.broadcast %cst_19 : f32 to vector<8x15xf32>
    %38 = arith.minimumf %37, %36 : vector<8x15xf32>
    %39 = math.log %38 : vector<8x15xf32>
    %c0_20 = arith.constant 0 : index
    %c0_21 = arith.constant 0 : index
    %40 = vector.load %arg1[%c0_20, %c0_21] : memref<8x15xf32, #tpu.memory_space<vmem>>, vector<8x15xf32>
    %41 = math.log %40 : vector<8x15xf32>
    %cst_22 = arith.constant 0.000000e+00 : f32
    %42 = vector.broadcast %cst_22 : f32 to vector<8x15xf32>
    %43 = arith.subf %42, %41 : vector<8x15xf32>
    %44 = math.log %43 : vector<8x15xf32>
    %cst_23 = arith.constant 0.000000e+00 : f32
    %45 = vector.broadcast %cst_23 : f32 to vector<8x15xf32>
    %46 = arith.subf %45, %44 : vector<8x15xf32>
    %47 = arith.addf %39, %46 : vector<8x15xf32>
    %cst_24 = arith.constant 2.000000e+00 : f32
    %48 = vector.broadcast %cst_24 : f32 to vector<8x15xf32>
    %49 = arith.mulf %47, %48 : vector<8x15xf32>
    %cst_25 = arith.constant dense<0xFF800000> : vector<8xf32>
    %50 = vector.multi_reduction <maximumf>, %49, %cst_25 [1] : vector<8x15xf32> to vector<8xf32>
    %51 = vector.shape_cast %50 : vector<8xf32> to vector<8x1xf32>
    %52 = vector.broadcast %51 : vector<8x1xf32> to vector<8x15xf32>
    %53 = arith.subf %49, %52 : vector<8x15xf32>
    %54 = math.exp %53 : vector<8x15xf32>
    %cst_26 = arith.constant dense<0.000000e+00> : vector<8xf32>
    %55 = vector.multi_reduction <add>, %54, %cst_26 [1] : vector<8x15xf32> to vector<8xf32>
    %56 = vector.shape_cast %55 : vector<8xf32> to vector<8x1xf32>
    %cst_27 = arith.constant 1.000000e+00 : f32
    %57 = vector.broadcast %cst_27 : f32 to vector<8x1xf32>
    %58 = arith.divf %57, %56 : vector<8x1xf32>
    %59 = vector.broadcast %58 : vector<8x1xf32> to vector<8x15xf32>
    %60 = arith.mulf %54, %59 : vector<8x15xf32>
    %c128 = arith.constant 128 : index
    %c0_28 = arith.constant 0 : index
    %61 = vector.load %arg2[%c128, %c0_28] : memref<240x128xf32, #tpu.memory_space<vmem>>, vector<15x3xf32>
    %cst_29 = arith.constant dense<0.000000e+00> : vector<8x3xf32>
    %62 = tpu.matmul %60, %61, %cst_29 {dimension_numbers = #tpu.dot_dimension_numbers<[1], [0], [0], [1], [0, 0, 1, 1], [], []>} : vector<8x15xf32>, vector<15x3xf32>, vector<8x3xf32> -> vector<8x3xf32>
    %c144 = arith.constant 144 : index
    %c0_30 = arith.constant 0 : index
    %63 = vector.load %arg2[%c144, %c0_30] : memref<240x128xf32, #tpu.memory_space<vmem>>, vector<3x32xf32>
    %cst_31 = arith.constant dense<0.000000e+00> : vector<8x32xf32>
    %64 = tpu.matmul %62, %63, %cst_31 {dimension_numbers = #tpu.dot_dimension_numbers<[1], [0], [0], [1], [0, 0, 1, 1], [], []>} : vector<8x3xf32>, vector<3x32xf32>, vector<8x32xf32> -> vector<8x32xf32>
    %c152 = arith.constant 152 : index
    %c0_32 = arith.constant 0 : index
    %65 = vector.load %arg2[%c152, %c0_32] : memref<240x128xf32, #tpu.memory_space<vmem>>, vector<1x32xf32>
    %66 = vector.broadcast %65 : vector<1x32xf32> to vector<8x32xf32>
    %67 = arith.addf %64, %66 : vector<8x32xf32>
    %cst_33 = arith.constant 0.000000e+00 : f32
    %68 = vector.broadcast %cst_33 : f32 to vector<8x32xf32>
    %69 = arith.maximumf %67, %68 : vector<8x32xf32>
    %c160 = arith.constant 160 : index
    %c0_34 = arith.constant 0 : index
    %70 = vector.load %arg2[%c160, %c0_34] : memref<240x128xf32, #tpu.memory_space<vmem>>, vector<32x32xf32>
    %cst_35 = arith.constant dense<0.000000e+00> : vector<8x32xf32>
    %71 = tpu.matmul %69, %70, %cst_35 {dimension_numbers = #tpu.dot_dimension_numbers<[1], [0], [0], [1], [0, 0, 1, 1], [], []>} : vector<8x32xf32>, vector<32x32xf32>, vector<8x32xf32> -> vector<8x32xf32>
    %c192 = arith.constant 192 : index
    %c0_36 = arith.constant 0 : index
    %72 = vector.load %arg2[%c192, %c0_36] : memref<240x128xf32, #tpu.memory_space<vmem>>, vector<1x32xf32>
    %73 = vector.broadcast %72 : vector<1x32xf32> to vector<8x32xf32>
    %74 = arith.addf %71, %73 : vector<8x32xf32>
    %cst_37 = arith.constant 0.000000e+00 : f32
    %75 = vector.broadcast %cst_37 : f32 to vector<8x32xf32>
    %76 = arith.maximumf %74, %75 : vector<8x32xf32>
    %c200 = arith.constant 200 : index
    %c0_38 = arith.constant 0 : index
    %77 = vector.load %arg2[%c200, %c0_38] : memref<240x128xf32, #tpu.memory_space<vmem>>, vector<32x128xf32>
    %cst_39 = arith.constant dense<0.000000e+00> : vector<8x128xf32>
    %78 = tpu.matmul %76, %77, %cst_39 {dimension_numbers = #tpu.dot_dimension_numbers<[1], [0], [0], [1], [0, 0, 1, 1], [], []>} : vector<8x32xf32>, vector<32x128xf32>, vector<8x128xf32> -> vector<8x128xf32>
    %c232 = arith.constant 232 : index
    %c0_40 = arith.constant 0 : index
    %79 = vector.load %arg2[%c232, %c0_40] : memref<240x128xf32, #tpu.memory_space<vmem>>, vector<1x128xf32>
    %80 = vector.broadcast %79 : vector<1x128xf32> to vector<8x128xf32>
    %81 = arith.addf %78, %80 : vector<8x128xf32>
    %c0_41 = arith.constant 0 : index
    %c0_42 = arith.constant 0 : index
    %82 = vector.load %arg3[%c0_41, %c0_42] : memref<8x128xf32, #tpu.memory_space<vmem>>, vector<8x128xf32>
    tpu.vector_store %arg3[%c0_41, %c0_42], %81 {strides = array<i32>} : memref<8x128xf32, #tpu.memory_space<vmem>>, vector<8x128xf32>,
    return
  }
}

</mosaic_0001>

<llo_original>
// kernel: tpu_custom_call.1
$region0: #{tpu_custom_call.1}
  #allocation0 [shape = 'u32[]', space=smem, size = 0x4, offset = 0x4, fixed_abs, tag = 'smem constant byte address 0x4 - core index']
  #allocation1 [shape = 'u32[144,128]{1,0:T(1,128)}', space=vmem, size = 0x12000, scoped, tag = 'internal scratch']
  %s0 = inlined_call_operand.hbm [shape: f32[8,16], index: 0, kind: input, shape index: {}]
  %s1 = inlined_call_operand.hbm [shape: f32[8,15], index: 1, kind: input, shape index: {}]
  %s2 = inlined_call_operand.hbm [shape: f32[240,128], index: 2, kind: input, shape index: {}]
  %s3 = inlined_call_operand.hbm [shape: f32[8,128], index: 3, kind: output, shape index: {}]
  %s4 = sld [smem:[#allocation0]]
  $region34: #{tpu_custom_call.1} parent=0
    _
  %s6 = ssub.s32 1, %s4
  %s7 = scalar_select 0, %s6, %s4
  $region1: #{tpu_custom_call.1} parent=0
    #allocation2 [shape = 'u8[4096]{0}', space=vmem, size = 0x1000, scoped, tag = 'input window, operand 0, single buffered']
    #allocation3 [shape = 's32[1]{0}', space=sflag, size = 0x4, scoped, tag = 'scoped memory for tpu_custom_call.1']
    #allocation4 [shape = 's32[1]{0}', space=sflag, size = 0x4, scoped, tag = 'scoped memory for tpu_custom_call.1']
    #allocation5 [shape = 'u8[4096]{0}', space=vmem, size = 0x1000, scoped, tag = 'input window, operand 1, single buffered']
    #allocation6 [shape = 's32[1]{0}', space=sflag, size = 0x4, scoped, tag = 'scoped memory for tpu_custom_call.1']
    #allocation7 [shape = 'u8[122880]{0}', space=vmem, size = 0x1e000, scoped, tag = 'input window, operand 2, single buffered']
    #allocation8 [shape = 'u8[4096]{0}', space=vmem, size = 0x1000, scoped, tag = 'output window, operand 0, single buffered']
    %8 = vsyncpa [#allocation3], 0
    %9 = vsyncpa [#allocation6], 0
    %10 = vsyncpa [#allocation4], 0
    // Predicated region
    $region2: #{tpu_custom_call.1} parent=1 // pred_check
      _
    $region3: #{tpu_custom_call.1} parent=1 // pred_check_branch
      %12 = sbr.rel (0) target = $region5
    $region4: #{tpu_custom_call.1} parent=1 // pred_region
      %s14 = ssub.s32 128, 128
      %15 = vsyncadd [#allocation3], %s14
      %s17 = sshll.u32 [#allocation2], 4
      %s18 = int_to_ptr.vmem [resolvable:$true] %s17
      %20 = dma.hbm_to_vmem [thread:$0]  %s0, 128, %s18, [#allocation3]
    $region5: #{tpu_custom_call.1} parent=1 // pred_fallthru
      _
    // Predicated region
    $region6: #{tpu_custom_call.1} parent=1 // pred_check
      _
    $region7: #{tpu_custom_call.1} parent=1 // pred_check_branch
      %22 = sbr.rel (0) target = $region9
    $region8: #{tpu_custom_call.1} parent=1 // pred_region
      %s24 = ssub.s32 128, 128
      %25 = vsyncadd [#allocation6], %s24
      %s27 = sshll.u32 [#allocation5], 4
      %s28 = int_to_ptr.vmem [resolvable:$true] %s27
      %30 = dma.hbm_to_vmem [thread:$0]  %s1, 128, %s28, [#allocation6]
    $region9: #{tpu_custom_call.1} parent=1 // pred_fallthru
      _
    // Predicated region
    $region10: #{tpu_custom_call.1} parent=1 // pred_check
      _
    $region11: #{tpu_custom_call.1} parent=1 // pred_check_branch
      %32 = sbr.rel (0) target = $region13
    $region12: #{tpu_custom_call.1} parent=1 // pred_region
      %s34 = ssub.s32 3840, 3840
      %35 = vsyncadd [#allocation6], %s34
      %s36 = sshll.u32 [#allocation7], 4
      %s37 = int_to_ptr.vmem [resolvable:$true] %s36
      %42 = dma.hbm_to_vmem [thread:$0]  %s2, 3840, %s37, [#allocation6], 128, 128, 8
    $region13: #{tpu_custom_call.1} parent=1 // pred_fallthru
      _
    // Predicated region
    $region14: #{tpu_custom_call.1} parent=1 // pred_check
      _
    $region15: #{tpu_custom_call.1} parent=1 // pred_check_branch
      %44 = sbr.rel (0) target = $region17
    $region16: #{tpu_custom_call.1} parent=1 // pred_region
      %45 = dma.done [#allocation3], 128
    $region17: #{tpu_custom_call.1} parent=1 // pred_fallthru
      _
    // Predicated region
    $region18: #{tpu_custom_call.1} parent=1 // pred_check
      _
    $region19: #{tpu_custom_call.1} parent=1 // pred_check_branch
      %47 = sbr.rel (0) target = $region21
    $region20: #{tpu_custom_call.1} parent=1 // pred_region
      %48 = dma.done [#allocation6], 128
    $region21: #{tpu_custom_call.1} parent=1 // pred_fallthru
      _
    // Predicated region
    $region22: #{tpu_custom_call.1} parent=1 // pred_check
      _
    $region23: #{tpu_custom_call.1} parent=1 // pred_check_branch
      %50 = sbr.rel (0) target = $region25
    $region24: #{tpu_custom_call.1} parent=1 // pred_region
      %51 = dma.done [#allocation6], 3840
    $region25: #{tpu_custom_call.1} parent=1 // pred_fallthru
      _
    %v52 = vld [vmem:[#allocation2] sm:$0xff]
    %v53 = vld [vmem:[#allocation7] sm:$0xff]
    %v54 = vld [vmem:[#allocation7 + $0x8] sm:$0xff]
    %v55 = vld [vmem:[#allocation7 + $0x10] sm:$0x1]
    %v56 = vlaneseq
    %v57 = vshrl.u32 %v56, 7
    %v58 = vsub.s32 0, %v57
    %v59 = vrot.slane %v55, %v58
    %vm60 = vcmask 130048
    %v62 = vsel %vm60, %v52, 0
    %64 = vmatprep.subr.mxu0 0.0
    %65 = vmatpush1.msra.mxu0 0.0
    %66 = vmatprep.subr.mxu0 0.0
    %67 = vmatpush1.msra.mxu0 0.0
    %68 = vmatprep.subr.mxu0 0.0
    %69 = vmatpush1.msra.mxu0 0.0
    %70 = vmatprep.subr.mxu0 0.0
    %71 = vmatpush1.msra.mxu0 0.0
    %72 = vmatprep.subr.mxu0 0.0
    %73 = vmatpush1.msra.mxu0 0.0
    %74 = vmatprep.subr.mxu0 0.0
    %75 = vmatpush1.msra.mxu0 0.0
    %76 = vmatprep.subr.mxu0 0.0
    %77 = vmatpush1.msra.mxu0 0.0
    %78 = vmatprep.subr.mxu0 0.0
    %79 = vmatpush1.msra.mxu0 0.0
    %80 = vmatprep.subr.mxu0 0.0
    %81 = vmatpush1.msra.mxu0 0.0
    %82 = vmatprep.subr.mxu0 0.0
    %83 = vmatpush1.msra.mxu0 0.0
    %84 = vmatprep.subr.mxu0 0.0
    %85 = vmatpush1.msra.mxu0 0.0
    %86 = vmatprep.subr.mxu0 0.0
    %87 = vmatpush1.msra.mxu0 0.0
    %88 = vmatprep.subr.mxu0 0.0
    %89 = vmatpush1.msra.mxu0 0.0
    %90 = vmatprep.subr.mxu0 0.0
    %91 = vmatpush1.msra.mxu0 0.0
    %92 = vmatprep.subr.mxu0 0.0
    %93 = vmatpush1.msra.mxu0 %v54
    %94 = vmatprep.subr.mxu0 0.0
    %95 = vmatpush1.msra.mxu0 %v53
    %96 = vmatprep.subr.mxu0 0.0
    %97 = vmatpush2.msra.mxu0 0.0
    %98 = vmatprep.subr.mxu0 0.0
    %99 = vmatpush2.msra.mxu0 0.0
    %100 = vmatprep.subr.mxu0 0.0
    %101 = vmatpush2.msra.mxu0 0.0
    %102 = vmatprep.subr.mxu0 0.0
    %103 = vmatpush2.msra.mxu0 0.0
    %104 = vmatprep.subr.mxu0 0.0
    %105 = vmatpush2.msra.mxu0 0.0
    %106 = vmatprep.subr.mxu0 0.0
    %107 = vmatpush2.msra.mxu0 0.0
    %108 = vmatprep.subr.mxu0 0.0
    %109 = vmatpush2.msra.mxu0 0.0
    %110 = vmatprep.subr.mxu0 0.0
    %111 = vmatpush2.msra.mxu0 0.0
    %112 = vmatprep.subr.mxu0 0.0
    %113 = vmatpush2.msra.mxu0 0.0
    %114 = vmatprep.subr.mxu0 0.0
    %115 = vmatpush2.msra.mxu0 0.0
    %116 = vmatprep.subr.mxu0 0.0
    %117 = vmatpush2.msra.mxu0 0.0
    %118 = vmatprep.subr.mxu0 0.0
    %119 = vmatpush2.msra.mxu0 0.0
    %120 = vmatprep.subr.mxu0 0.0
    %121 = vmatpush2.msra.mxu0 0.0
    %122 = vmatprep.subr.mxu0 0.0
    %123 = vmatpush2.msra.mxu0 0.0
    %124 = vmatprep.subr.mxu0 0.0
    %125 = vmatpush2.msra.mxu0 0.0
    %126 = vmatprep.subr.mxu0 0.0
    %127 = vmatpush2.msra.mxu0 0.0
    %128 = vmatprep.mubr.f32.mxu0 0.0
    %129 = vmatmul.mubr.f32.gmra.mxu0 %v62
    %v130 = vpop.f32.mrf.mxu0
    %v131 = vadd.f32 %v59, %v130
    %v132 = vpop.f32.mrf.mxu0
    %133 = vdwg.mxu0
    %v134 = vmax.f32 %v131, 0.0
    %v135 = vld [vmem:[#allocation7 + $0x18] sm:$0xff]
    %v136 = vld [vmem:[#allocation7 + $0x20] sm:$0xff]
    %v137 = vld [vmem:[#allocation7 + $0x28] sm:$0xff]
    %v138 = vld [vmem:[#allocation7 + $0x30] sm:$0xff]
    %v139 = vld [vmem:[#allocation7 + $0x38] sm:$0x1]
    %v140 = vlaneseq
    %v141 = vshrl.u32 %v140, 7
    %v142 = vsub.s32 0, %v141
    %v143 = vrot.slane %v139, %v142
    %vm144 = vcmask 261120
    %v146 = vsel %vm144, %v134, 0
    %148 = vmatprep.subr.mxu0 0.0
    %149 = vmatpush1.msra.mxu0 0.0
    %150 = vmatprep.subr.mxu0 0.0
    %151 = vmatpush1.msra.mxu0 0.0
    %152 = vmatprep.subr.mxu0 0.0
    %153 = vmatpush1.msra.mxu0 0.0
    %154 = vmatprep.subr.mxu0 0.0
    %155 = vmatpush1.msra.mxu0 0.0
    %156 = vmatprep.subr.mxu0 0.0
    %157 = vmatpush1.msra.mxu0 0.0
    %158 = vmatprep.subr.mxu0 0.0
    %159 = vmatpush1.msra.mxu0 0.0
    %160 = vmatprep.subr.mxu0 0.0
    %161 = vmatpush1.msra.mxu0 0.0
    %162 = vmatprep.subr.mxu0 0.0
    %163 = vmatpush1.msra.mxu0 0.0
    %164 = vmatprep.subr.mxu0 0.0
    %165 = vmatpush1.msra.mxu0 0.0
    %166 = vmatprep.subr.mxu0 0.0
    %167 = vmatpush1.msra.mxu0 0.0
    %168 = vmatprep.subr.mxu0 0.0
    %169 = vmatpush1.msra.mxu0 0.0
    %170 = vmatprep.subr.mxu0 0.0
    %171 = vmatpush1.msra.mxu0 0.0
    %172 = vmatprep.subr.mxu0 0.0
    %173 = vmatpush1.msra.mxu0 %v138
    %174 = vmatprep.subr.mxu0 0.0
    %175 = vmatpush1.msra.mxu0 %v137
    %176 = vmatprep.subr.mxu0 0.0
    %177 = vmatpush1.msra.mxu0 %v136
    %178 = vmatprep.subr.mxu0 0.0
    %179 = vmatpush1.msra.mxu0 %v135
    %180 = vmatprep.subr.mxu0 0.0
    %181 = vmatpush2.msra.mxu0 0.0
    %182 = vmatprep.subr.mxu0 0.0
    %183 = vmatpush2.msra.mxu0 0.0
    %184 = vmatprep.subr.mxu0 0.0
    %185 = vmatpush2.msra.mxu0 0.0
    %186 = vmatprep.subr.mxu0 0.0
    %187 = vmatpush2.msra.mxu0 0.0
    %188 = vmatprep.subr.mxu0 0.0
    %189 = vmatpush2.msra.mxu0 0.0
    %190 = vmatprep.subr.mxu0 0.0
    %191 = vmatpush2.msra.mxu0 0.0
    %192 = vmatprep.subr.mxu0 0.0
    %193 = vmatpush2.msra.mxu0 0.0
    %194 = vmatprep.subr.mxu0 0.0
    %195 = vmatpush2.msra.mxu0 0.0
    %196 = vmatprep.subr.mxu0 0.0
    %197 = vmatpush2.msra.mxu0 0.0
    %198 = vmatprep.subr.mxu0 0.0
    %199 = vmatpush2.msra.mxu0 0.0
    %200 = vmatprep.subr.mxu0 0.0
    %201 = vmatpush2.msra.mxu0 0.0
    %202 = vmatprep.subr.mxu0 0.0
    %203 = vmatpush2.msra.mxu0 0.0
    %204 = vmatprep.subr.mxu0 0.0
    %205 = vmatpush2.msra.mxu0 0.0
    %206 = vmatprep.subr.mxu0 0.0
    %207 = vmatpush2.msra.mxu0 0.0
    %208 = vmatprep.subr.mxu0 0.0
    %209 = vmatpush2.msra.mxu0 0.0
    %210 = vmatprep.subr.mxu0 0.0
    %211 = vmatpush2.msra.mxu0 0.0
    %212 = vmatprep.mubr.f32.mxu0 0.0
    %213 = vmatmul.mubr.f32.gmra.mxu0 %v146
    %v214 = vpop.f32.mrf.mxu0
    %v215 = vadd.f32 %v143, %v214
    %v216 = vpop.f32.mrf.mxu0
    %217 = vdwg.mxu0
    %v218 = vmax.f32 %v215, 0.0
    %v219 = vld [vmem:[#allocation7 + $0x40] sm:$0xff]
    %v220 = vld [vmem:[#allocation7 + $0x48] sm:$0xff]
    %v221 = vld [vmem:[#allocation7 + $0x50] sm:$0xff]
    %v222 = vld [vmem:[#allocation7 + $0x58] sm:$0xff]
    %v223 = vld [vmem:[#allocation7 + $0x60] sm:$0x1]
    %v224 = vlaneseq
    %v225 = vshrl.u32 %v224, 7
    %v226 = vsub.s32 0, %v225
    %v227 = vrot.slane %v223, %v226
    %v229 = vsel %vm144, %v218, 0
    %231 = vmatprep.subr.mxu0 0.0
    %232 = vmatpush1.msra.mxu0 0.0
    %233 = vmatprep.subr.mxu0 0.0
    %234 = vmatpush1.msra.mxu0 0.0
    %235 = vmatprep.subr.mxu0 0.0
    %236 = vmatpush1.msra.mxu0 0.0
    %237 = vmatprep.subr.mxu0 0.0
    %238 = vmatpush1.msra.mxu0 0.0
    %239 = vmatprep.subr.mxu0 0.0
    %240 = vmatpush1.msra.mxu0 0.0
    %241 = vmatprep.subr.mxu0 0.0
    %242 = vmatpush1.msra.mxu0 0.0
    %243 = vmatprep.subr.mxu0 0.0
    %244 = vmatpush1.msra.mxu0 0.0
    %245 = vmatprep.subr.mxu0 0.0
    %246 = vmatpush1.msra.mxu0 0.0
    %247 = vmatprep.subr.mxu0 0.0
    %248 = vmatpush1.msra.mxu0 0.0
    %249 = vmatprep.subr.mxu0 0.0
    %250 = vmatpush1.msra.mxu0 0.0
    %251 = vmatprep.subr.mxu0 0.0
    %252 = vmatpush1.msra.mxu0 0.0
    %253 = vmatprep.subr.mxu0 0.0
    %254 = vmatpush1.msra.mxu0 0.0
    %255 = vmatprep.subr.mxu0 0.0
    %256 = vmatpush1.msra.mxu0 %v222
    %257 = vmatprep.subr.mxu0 0.0
    %258 = vmatpush1.msra.mxu0 %v221
    %259 = vmatprep.subr.mxu0 0.0
    %260 = vmatpush1.msra.mxu0 %v220
    %261 = vmatprep.subr.mxu0 0.0
    %262 = vmatpush1.msra.mxu0 %v219
    %263 = vmatprep.subr.mxu0 0.0
    %264 = vmatpush2.msra.mxu0 0.0
    %265 = vmatprep.subr.mxu0 0.0
    %266 = vmatpush2.msra.mxu0 0.0
    %267 = vmatprep.subr.mxu0 0.0
    %268 = vmatpush2.msra.mxu0 0.0
    %269 = vmatprep.subr.mxu0 0.0
    %270 = vmatpush2.msra.mxu0 0.0
    %271 = vmatprep.subr.mxu0 0.0
    %272 = vmatpush2.msra.mxu0 0.0
    %273 = vmatprep.subr.mxu0 0.0
    %274 = vmatpush2.msra.mxu0 0.0
    %275 = vmatprep.subr.mxu0 0.0
    %276 = vmatpush2.msra.mxu0 0.0
    %277 = vmatprep.subr.mxu0 0.0
    %278 = vmatpush2.msra.mxu0 0.0
    %279 = vmatprep.subr.mxu0 0.0
    %280 = vmatpush2.msra.mxu0 0.0
    %281 = vmatprep.subr.mxu0 0.0
    %282 = vmatpush2.msra.mxu0 0.0
    %283 = vmatprep.subr.mxu0 0.0
    %284 = vmatpush2.msra.mxu0 0.0
    %285 = vmatprep.subr.mxu0 0.0
    %286 = vmatpush2.msra.mxu0 0.0
    %287 = vmatprep.subr.mxu0 0.0
    %288 = vmatpush2.msra.mxu0 0.0
    %289 = vmatprep.subr.mxu0 0.0
    %290 = vmatpush2.msra.mxu0 0.0
    %291 = vmatprep.subr.mxu0 0.0
    %292 = vmatpush2.msra.mxu0 0.0
    %293 = vmatprep.subr.mxu0 0.0
    %294 = vmatpush2.msra.mxu0 0.0
    %295 = vmatprep.mubr.f32.mxu0 0.0
    %296 = vmatmul.mubr.f32.gmra.mxu0 %v229
    %v297 = vpop.f32.mrf.mxu0
    %v298 = vadd.f32 %v227, %v297
    %v299 = vpop.f32.mrf.mxu0
    %300 = vdwg.mxu0
    %vm301 = vcmask 23552
    %v302 = vsel %vm301, %v298, -inf
    %303 = vmax.xlane.f32.xlu0 %v302
    %v304 = vpop.xlane.xlu0 %303
    %v305 = vsub.f32 %v298, %v304
    %v306 = vmul.f32 %v305, 1.442695
    %v307 = vpow.pop %v306
    %v308 = vsel %vm301, %v307, 0.0
    %309 = vadd.xlane.f32.xlu0 %v308
    %v310 = vpop.xlane.xlu0 %309
    %v311 = vlog2.pop %v310
    %v312 = vmul.f32 %v311, 0.6931472
    %v313 = vsub.f32 %v305, %v312
    %v314 = vld [vmem:[#allocation7 + $0x68] sm:$0x7]
    %v316 = vsel %vm301, %v313, 0
    %vm318 = vcmask 1042432
    %v320 = vsel %vm318, %v314, 0
    %322 = vmatprep.subr.mxu0 0.0
    %323 = vmatpush1.msra.mxu0 0.0
    %324 = vmatprep.subr.mxu0 0.0
    %325 = vmatpush1.msra.mxu0 0.0
    %326 = vmatprep.subr.mxu0 0.0
    %327 = vmatpush1.msra.mxu0 0.0
    %328 = vmatprep.subr.mxu0 0.0
    %329 = vmatpush1.msra.mxu0 0.0
    %330 = vmatprep.subr.mxu0 0.0
    %331 = vmatpush1.msra.mxu0 0.0
    %332 = vmatprep.subr.mxu0 0.0
    %333 = vmatpush1.msra.mxu0 0.0
    %334 = vmatprep.subr.mxu0 0.0
    %335 = vmatpush1.msra.mxu0 0.0
    %336 = vmatprep.subr.mxu0 0.0
    %337 = vmatpush1.msra.mxu0 0.0
    %338 = vmatprep.subr.mxu0 0.0
    %339 = vmatpush1.msra.mxu0 0.0
    %340 = vmatprep.subr.mxu0 0.0
    %341 = vmatpush1.msra.mxu0 0.0
    %342 = vmatprep.subr.mxu0 0.0
    %343 = vmatpush1.msra.mxu0 0.0
    %344 = vmatprep.subr.mxu0 0.0
    %345 = vmatpush1.msra.mxu0 0.0
    %346 = vmatprep.subr.mxu0 0.0
    %347 = vmatpush1.msra.mxu0 0.0
    %348 = vmatprep.subr.mxu0 0.0
    %349 = vmatpush1.msra.mxu0 0.0
    %350 = vmatprep.subr.mxu0 0.0
    %351 = vmatpush1.msra.mxu0 0.0
    %352 = vmatprep.subr.mxu0 0.0
    %353 = vmatpush1.msra.mxu0 %v320
    %354 = vmatprep.subr.mxu0 0.0
    %355 = vmatpush2.msra.mxu0 0.0
    %356 = vmatprep.subr.mxu0 0.0
    %357 = vmatpush2.msra.mxu0 0.0
    %358 = vmatprep.subr.mxu0 0.0
    %359 = vmatpush2.msra.mxu0 0.0
    %360 = vmatprep.subr.mxu0 0.0
    %361 = vmatpush2.msra.mxu0 0.0
    %362 = vmatprep.subr.mxu0 0.0
    %363 = vmatpush2.msra.mxu0 0.0
    %364 = vmatprep.subr.mxu0 0.0
    %365 = vmatpush2.msra.mxu0 0.0
    %366 = vmatprep.subr.mxu0 0.0
    %367 = vmatpush2.msra.mxu0 0.0
    %368 = vmatprep.subr.mxu0 0.0
    %369 = vmatpush2.msra.mxu0 0.0
    %370 = vmatprep.subr.mxu0 0.0
    %371 = vmatpush2.msra.mxu0 0.0
    %372 = vmatprep.subr.mxu0 0.0
    %373 = vmatpush2.msra.mxu0 0.0
    %374 = vmatprep.subr.mxu0 0.0
    %375 = vmatpush2.msra.mxu0 0.0
    %376 = vmatprep.subr.mxu0 0.0
    %377 = vmatpush2.msra.mxu0 0.0
    %378 = vmatprep.subr.mxu0 0.0
    %379 = vmatpush2.msra.mxu0 0.0
    %380 = vmatprep.subr.mxu0 0.0
    %381 = vmatpush2.msra.mxu0 0.0
    %382 = vmatprep.subr.mxu0 0.0
    %383 = vmatpush2.msra.mxu0 0.0
    %384 = vmatprep.subr.mxu0 0.0
    %385 = vmatpush2.msra.mxu0 0.0
    %386 = vmatprep.mubr.f32.mxu0 0.0
    %387 = vmatmul.mubr.f32.gmra.mxu0 %v316
    %v388 = vpop.f32.mrf.mxu0
    %v389 = vadd.f32 0.0, %v388
    %v390 = vpop.f32.mrf.mxu0
    %391 = vdwg.mxu0
    %v392 = vmul.f32 %v389, 1.442695
    %v393 = vpow.pop %v392
    %v394 = vld [vmem:[#allocation7 + $0x70] sm:$0xff]
    %v395 = vld [vmem:[#allocation7 + $0x78] sm:$0x7f]
    %vm396 = vcmask 121856
    %v398 = vsel %vm396, %v393, 0
    %vm400 = vcmask 1046528
    %v402 = vsel %vm400, %v395, 0
    %404 = vmatprep.subr.mxu0 0.0
    %405 = vmatpush1.msra.mxu0 0.0
    %406 = vmatprep.subr.mxu0 0.0
    %407 = vmatpush1.msra.mxu0 0.0
    %408 = vmatprep.subr.mxu0 0.0
    %409 = vmatpush1.msra.mxu0 0.0
    %410 = vmatprep.subr.mxu0 0.0
    %411 = vmatpush1.msra.mxu0 0.0
    %412 = vmatprep.subr.mxu0 0.0
    %413 = vmatpush1.msra.mxu0 0.0
    %414 = vmatprep.subr.mxu0 0.0
    %415 = vmatpush1.msra.mxu0 0.0
    %416 = vmatprep.subr.mxu0 0.0
    %417 = vmatpush1.msra.mxu0 0.0
    %418 = vmatprep.subr.mxu0 0.0
    %419 = vmatpush1.msra.mxu0 0.0
    %420 = vmatprep.subr.mxu0 0.0
    %421 = vmatpush1.msra.mxu0 0.0
    %422 = vmatprep.subr.mxu0 0.0
    %423 = vmatpush1.msra.mxu0 0.0
    %424 = vmatprep.subr.mxu0 0.0
    %425 = vmatpush1.msra.mxu0 0.0
    %426 = vmatprep.subr.mxu0 0.0
    %427 = vmatpush1.msra.mxu0 0.0
    %428 = vmatprep.subr.mxu0 0.0
    %429 = vmatpush1.msra.mxu0 0.0
    %430 = vmatprep.subr.mxu0 0.0
    %431 = vmatpush1.msra.mxu0 0.0
    %432 = vmatprep.subr.mxu0 0.0
    %433 = vmatpush1.msra.mxu0 %v402
    %434 = vmatprep.subr.mxu0 0.0
    %435 = vmatpush1.msra.mxu0 %v394
    %436 = vmatprep.subr.mxu0 0.0
    %437 = vmatpush2.msra.mxu0 0.0
    %438 = vmatprep.subr.mxu0 0.0
    %439 = vmatpush2.msra.mxu0 0.0
    %440 = vmatprep.subr.mxu0 0.0
    %441 = vmatpush2.msra.mxu0 0.0
    %442 = vmatprep.subr.mxu0 0.0
    %443 = vmatpush2.msra.mxu0 0.0
    %444 = vmatprep.subr.mxu0 0.0
    %445 = vmatpush2.msra.mxu0 0.0
    %446 = vmatprep.subr.mxu0 0.0
    %447 = vmatpush2.msra.mxu0 0.0
    %448 = vmatprep.subr.mxu0 0.0
    %449 = vmatpush2.msra.mxu0 0.0
    %450 = vmatprep.subr.mxu0 0.0
    %451 = vmatpush2.msra.mxu0 0.0
    %452 = vmatprep.subr.mxu0 0.0
    %453 = vmatpush2.msra.mxu0 0.0
    %454 = vmatprep.subr.mxu0 0.0
    %455 = vmatpush2.msra.mxu0 0.0
    %456 = vmatprep.subr.mxu0 0.0
    %457 = vmatpush2.msra.mxu0 0.0
    %458 = vmatprep.subr.mxu0 0.0
    %459 = vmatpush2.msra.mxu0 0.0
    %460 = vmatprep.subr.mxu0 0.0
    %461 = vmatpush2.msra.mxu0 0.0
    %462 = vmatprep.subr.mxu0 0.0
    %463 = vmatpush2.msra.mxu0 0.0
    %464 = vmatprep.subr.mxu0 0.0
    %465 = vmatpush2.msra.mxu0 0.0
    %466 = vmatprep.subr.mxu0 0.0
    %467 = vmatpush2.msra.mxu0 0.0
    %468 = vmatprep.mubr.f32.mxu0 0.0
    %469 = vmatmul.mubr.f32.gmra.mxu0 %v398
    %v470 = vpop.f32.mrf.mxu0
    %v471 = vadd.f32 0.0, %v470
    %v472 = vpop.f32.mrf.mxu0
    %473 = vdwg.mxu0
    %v474 = vmax.f32 %v471, 1.1920929e-07
    %v475 = vmin.f32 %v474, 0.9999999
    %v476 = vlog2.pop %v475
    %v477 = vmul.f32 %v476, 0.6931472
    %v478 = vld [vmem:[#allocation5] sm:$0xff]
    %v479 = vlog2.pop %v478
    %v480 = vmul.f32 %v479, 0.6931472
    %v481 = vsub.f32 0.0, %v480
    %v482 = vlog2.pop %v481
    %v483 = vmul.f32 %v482, 0.6931472
    %v484 = vsub.f32 0.0, %v483
    %v485 = vadd.f32 %v477, %v484
    %v486 = vmul.f32 %v485, 2.0
    %v487 = vsel %vm396, %v486, -inf
    %488 = vmax.xlane.f32.xlu0 %v487
    %v489 = vpop.xlane.xlu0 %488
    %v490 = vsub.f32 %v486, %v489
    %v491 = vmul.f32 %v490, 1.442695
    %v492 = vpow.pop %v491
    %v493 = vsel %vm396, %v492, 0.0
    %494 = vadd.xlane.f32.xlu0 %v493
    %v495 = vpop.xlane.xlu0 %494
    %v496 = vrcp.pop %v495
    %v497 = vmul.f32 1.0, %v496
    %v498 = vmul.f32 %v492, %v497
    %v499 = vld [vmem:[#allocation7 + $0x80] sm:$0xff]
    %v500 = vld [vmem:[#allocation7 + $0x88] sm:$0x7f]
    %v502 = vsel %vm396, %v498, 0
    %v505 = vsel %vm400, %v500, 0
    %507 = vmatprep.subr.mxu0 0.0
    %508 = vmatpush1.msra.mxu0 0.0
    %509 = vmatprep.subr.mxu0 0.0
    %510 = vmatpush1.msra.mxu0 0.0
    %511 = vmatprep.subr.mxu0 0.0
    %512 = vmatpush1.msra.mxu0 0.0
    %513 = vmatprep.subr.mxu0 0.0
    %514 = vmatpush1.msra.mxu0 0.0
    %515 = vmatprep.subr.mxu0 0.0
    %516 = vmatpush1.msra.mxu0 0.0
    %517 = vmatprep.subr.mxu0 0.0
    %518 = vmatpush1.msra.mxu0 0.0
    %519 = vmatprep.subr.mxu0 0.0
    %520 = vmatpush1.msra.mxu0 0.0
    %521 = vmatprep.subr.mxu0 0.0
    %522 = vmatpush1.msra.mxu0 0.0
    %523 = vmatprep.subr.mxu0 0.0
    %524 = vmatpush1.msra.mxu0 0.0
    %525 = vmatprep.subr.mxu0 0.0
    %526 = vmatpush1.msra.mxu0 0.0
    %527 = vmatprep.subr.mxu0 0.0
    %528 = vmatpush1.msra.mxu0 0.0
    %529 = vmatprep.subr.mxu0 0.0
    %530 = vmatpush1.msra.mxu0 0.0
    %531 = vmatprep.subr.mxu0 0.0
    %532 = vmatpush1.msra.mxu0 0.0
    %533 = vmatprep.subr.mxu0 0.0
    %534 = vmatpush1.msra.mxu0 0.0
    %535 = vmatprep.subr.mxu0 0.0
    %536 = vmatpush1.msra.mxu0 %v505
    %537 = vmatprep.subr.mxu0 0.0
    %538 = vmatpush1.msra.mxu0 %v499
    %539 = vmatprep.subr.mxu0 0.0
    %540 = vmatpush2.msra.mxu0 0.0
    %541 = vmatprep.subr.mxu0 0.0
    %542 = vmatpush2.msra.mxu0 0.0
    %543 = vmatprep.subr.mxu0 0.0
    %544 = vmatpush2.msra.mxu0 0.0
    %545 = vmatprep.subr.mxu0 0.0
    %546 = vmatpush2.msra.mxu0 0.0
    %547 = vmatprep.subr.mxu0 0.0
    %548 = vmatpush2.msra.mxu0 0.0
    %549 = vmatprep.subr.mxu0 0.0
    %550 = vmatpush2.msra.mxu0 0.0
    %551 = vmatprep.subr.mxu0 0.0
    %552 = vmatpush2.msra.mxu0 0.0
    %553 = vmatprep.subr.mxu0 0.0
    %554 = vmatpush2.msra.mxu0 0.0
    %555 = vmatprep.subr.mxu0 0.0
    %556 = vmatpush2.msra.mxu0 0.0
    %557 = vmatprep.subr.mxu0 0.0
    %558 = vmatpush2.msra.mxu0 0.0
    %559 = vmatprep.subr.mxu0 0.0
    %560 = vmatpush2.msra.mxu0 0.0
    %561 = vmatprep.subr.mxu0 0.0
    %562 = vmatpush2.msra.mxu0 0.0
    %563 = vmatprep.subr.mxu0 0.0
    %564 = vmatpush2.msra.mxu0 0.0
    %565 = vmatprep.subr.mxu0 0.0
    %566 = vmatpush2.msra.mxu0 0.0
    %567 = vmatprep.subr.mxu0 0.0
    %568 = vmatpush2.msra.mxu0 0.0
    %569 = vmatprep.subr.mxu0 0.0
    %570 = vmatpush2.msra.mxu0 0.0
    %571 = vmatprep.mubr.f32.mxu0 0.0
    %572 = vmatmul.mubr.f32.gmra.mxu0 %v502
    %v573 = vpop.f32.mrf.mxu0
    %v574 = vadd.f32 0.0, %v573
    %v575 = vpop.f32.mrf.mxu0
    %576 = vdwg.mxu0
    %v577 = vld [vmem:[#allocation7 + $0x90] sm:$0x7]
    %v578 = vld [vmem:[#allocation7 + $0x98] sm:$0x1]
    %v579 = vlaneseq
    %v580 = vshrl.u32 %v579, 7
    %v581 = vsub.s32 0, %v580
    %v582 = vrot.slane %v578, %v581
    %v584 = vsel %vm301, %v574, 0
    %v587 = vsel %vm318, %v577, 0
    %589 = vmatprep.subr.mxu0 0.0
    %590 = vmatpush1.msra.mxu0 0.0
    %591 = vmatprep.subr.mxu0 0.0
    %592 = vmatpush1.msra.mxu0 0.0
    %593 = vmatprep.subr.mxu0 0.0
    %594 = vmatpush1.msra.mxu0 0.0
    %595 = vmatprep.subr.mxu0 0.0
    %596 = vmatpush1.msra.mxu0 0.0
    %597 = vmatprep.subr.mxu0 0.0
    %598 = vmatpush1.msra.mxu0 0.0
    %599 = vmatprep.subr.mxu0 0.0
    %600 = vmatpush1.msra.mxu0 0.0
    %601 = vmatprep.subr.mxu0 0.0
    %602 = vmatpush1.msra.mxu0 0.0
    %603 = vmatprep.subr.mxu0 0.0
    %604 = vmatpush1.msra.mxu0 0.0
    %605 = vmatprep.subr.mxu0 0.0
    %606 = vmatpush1.msra.mxu0 0.0
    %607 = vmatprep.subr.mxu0 0.0
    %608 = vmatpush1.msra.mxu0 0.0
    %609 = vmatprep.subr.mxu0 0.0
    %610 = vmatpush1.msra.mxu0 0.0
    %611 = vmatprep.subr.mxu0 0.0
    %612 = vmatpush1.msra.mxu0 0.0
    %613 = vmatprep.subr.mxu0 0.0
    %614 = vmatpush1.msra.mxu0 0.0
    %615 = vmatprep.subr.mxu0 0.0
    %616 = vmatpush1.msra.mxu0 0.0
    %617 = vmatprep.subr.mxu0 0.0
    %618 = vmatpush1.msra.mxu0 0.0
    %619 = vmatprep.subr.mxu0 0.0
    %620 = vmatpush1.msra.mxu0 %v587
    %621 = vmatprep.subr.mxu0 0.0
    %622 = vmatpush2.msra.mxu0 0.0
    %623 = vmatprep.subr.mxu0 0.0
    %624 = vmatpush2.msra.mxu0 0.0
    %625 = vmatprep.subr.mxu0 0.0
    %626 = vmatpush2.msra.mxu0 0.0
    %627 = vmatprep.subr.mxu0 0.0
    %628 = vmatpush2.msra.mxu0 0.0
    %629 = vmatprep.subr.mxu0 0.0
    %630 = vmatpush2.msra.mxu0 0.0
    %631 = vmatprep.subr.mxu0 0.0
    %632 = vmatpush2.msra.mxu0 0.0
    %633 = vmatprep.subr.mxu0 0.0
    %634 = vmatpush2.msra.mxu0 0.0
    %635 = vmatprep.subr.mxu0 0.0
    %636 = vmatpush2.msra.mxu0 0.0
    %637 = vmatprep.subr.mxu0 0.0
    %638 = vmatpush2.msra.mxu0 0.0
    %639 = vmatprep.subr.mxu0 0.0
    %640 = vmatpush2.msra.mxu0 0.0
    %641 = vmatprep.subr.mxu0 0.0
    %642 = vmatpush2.msra.mxu0 0.0
    %643 = vmatprep.subr.mxu0 0.0
    %644 = vmatpush2.msra.mxu0 0.0
    %645 = vmatprep.subr.mxu0 0.0
    %646 = vmatpush2.msra.mxu0 0.0
    %647 = vmatprep.subr.mxu0 0.0
    %648 = vmatpush2.msra.mxu0 0.0
    %649 = vmatprep.subr.mxu0 0.0
    %650 = vmatpush2.msra.mxu0 0.0
    %651 = vmatprep.subr.mxu0 0.0
    %652 = vmatpush2.msra.mxu0 0.0
    %653 = vmatprep.mubr.f32.mxu0 0.0
    %654 = vmatmul.mubr.f32.gmra.mxu0 %v584
    %v655 = vpop.f32.mrf.mxu0
    %v656 = vadd.f32 %v582, %v655
    %v657 = vpop.f32.mrf.mxu0
    %658 = vdwg.mxu0
    %v659 = vmax.f32 %v656, 0.0
    %v660 = vld [vmem:[#allocation7 + $0xa0] sm:$0xff]
    %v661 = vld [vmem:[#allocation7 + $0xa8] sm:$0xff]
    %v662 = vld [vmem:[#allocation7 + $0xb0] sm:$0xff]
    %v663 = vld [vmem:[#allocation7 + $0xb8] sm:$0xff]
    %v664 = vld [vmem:[#allocation7 + $0xc0] sm:$0x1]
    %v665 = vlaneseq
    %v666 = vshrl.u32 %v665, 7
    %v667 = vsub.s32 0, %v666
    %v668 = vrot.slane %v664, %v667
    %v670 = vsel %vm144, %v659, 0
    %672 = vmatprep.subr.mxu0 0.0
    %673 = vmatpush1.msra.mxu0 0.0
    %674 = vmatprep.subr.mxu0 0.0
    %675 = vmatpush1.msra.mxu0 0.0
    %676 = vmatprep.subr.mxu0 0.0
    %677 = vmatpush1.msra.mxu0 0.0
    %678 = vmatprep.subr.mxu0 0.0
    %679 = vmatpush1.msra.mxu0 0.0
    %680 = vmatprep.subr.mxu0 0.0
    %681 = vmatpush1.msra.mxu0 0.0
    %682 = vmatprep.subr.mxu0 0.0
    %683 = vmatpush1.msra.mxu0 0.0
    %684 = vmatprep.subr.mxu0 0.0
    %685 = vmatpush1.msra.mxu0 0.0
    %686 = vmatprep.subr.mxu0 0.0
    %687 = vmatpush1.msra.mxu0 0.0
    %688 = vmatprep.subr.mxu0 0.0
    %689 = vmatpush1.msra.mxu0 0.0
    %690 = vmatprep.subr.mxu0 0.0
    %691 = vmatpush1.msra.mxu0 0.0
    %692 = vmatprep.subr.mxu0 0.0
    %693 = vmatpush1.msra.mxu0 0.0
    %694 = vmatprep.subr.mxu0 0.0
    %695 = vmatpush1.msra.mxu0 0.0
    %696 = vmatprep.subr.mxu0 0.0
    %697 = vmatpush1.msra.mxu0 %v663
    %698 = vmatprep.subr.mxu0 0.0
    %699 = vmatpush1.msra.mxu0 %v662
    %700 = vmatprep.subr.mxu0 0.0
    %701 = vmatpush1.msra.mxu0 %v661
    %702 = vmatprep.subr.mxu0 0.0
    %703 = vmatpush1.msra.mxu0 %v660
    %704 = vmatprep.subr.mxu0 0.0
    %705 = vmatpush2.msra.mxu0 0.0
    %706 = vmatprep.subr.mxu0 0.0
    %707 = vmatpush2.msra.mxu0 0.0
    %708 = vmatprep.subr.mxu0 0.0
    %709 = vmatpush2.msra.mxu0 0.0
    %710 = vmatprep.subr.mxu0 0.0
    %711 = vmatpush2.msra.mxu0 0.0
    %712 = vmatprep.subr.mxu0 0.0
    %713 = vmatpush2.msra.mxu0 0.0
    %714 = vmatprep.subr.mxu0 0.0
    %715 = vmatpush2.msra.mxu0 0.0
    %716 = vmatprep.subr.mxu0 0.0
    %717 = vmatpush2.msra.mxu0 0.0
    %718 = vmatprep.subr.mxu0 0.0
    %719 = vmatpush2.msra.mxu0 0.0
    %720 = vmatprep.subr.mxu0 0.0
    %721 = vmatpush2.msra.mxu0 0.0
    %722 = vmatprep.subr.mxu0 0.0
    %723 = vmatpush2.msra.mxu0 0.0
    %724 = vmatprep.subr.mxu0 0.0
    %725 = vmatpush2.msra.mxu0 0.0
    %726 = vmatprep.subr.mxu0 0.0
    %727 = vmatpush2.msra.mxu0 0.0
    %728 = vmatprep.subr.mxu0 0.0
    %729 = vmatpush2.msra.mxu0 0.0
    %730 = vmatprep.subr.mxu0 0.0
    %731 = vmatpush2.msra.mxu0 0.0
    %732 = vmatprep.subr.mxu0 0.0
    %733 = vmatpush2.msra.mxu0 0.0
    %734 = vmatprep.subr.mxu0 0.0
    %735 = vmatpush2.msra.mxu0 0.0
    %736 = vmatprep.mubr.f32.mxu0 0.0
    %737 = vmatmul.mubr.f32.gmra.mxu0 %v670
    %v738 = vpop.f32.mrf.mxu0
    %v739 = vadd.f32 %v668, %v738
    %v740 = vpop.f32.mrf.mxu0
    %741 = vdwg.mxu0
    %v742 = vmax.f32 %v739, 0.0
    %v743 = vld [vmem:[#allocation7 + $0xc8] sm:$0xff]
    %v744 = vld [vmem:[#allocation7 + $0xd0] sm:$0xff]
    %v745 = vld [vmem:[#allocation7 + $0xd8] sm:$0xff]
    %v746 = vld [vmem:[#allocation7 + $0xe0] sm:$0xff]
    %v747 = vld [vmem:[#allocation7 + $0xe8] sm:$0x1]
    %v748 = vlaneseq
    %v749 = vshrl.u32 %v748, 7
    %v750 = vsub.s32 0, %v749
    %v751 = vrot.slane %v747, %v750
    %v753 = vsel %vm144, %v742, 0
    %755 = vmatprep.subr.mxu0 0.0
    %756 = vmatpush1.msra.mxu0 0.0
    %757 = vmatprep.subr.mxu0 0.0
    %758 = vmatpush1.msra.mxu0 0.0
    %759 = vmatprep.subr.mxu0 0.0
    %760 = vmatpush1.msra.mxu0 0.0
    %761 = vmatprep.subr.mxu0 0.0
    %762 = vmatpush1.msra.mxu0 0.0
    %763 = vmatprep.subr.mxu0 0.0
    %764 = vmatpush1.msra.mxu0 0.0
    %765 = vmatprep.subr.mxu0 0.0
    %766 = vmatpush1.msra.mxu0 0.0
    %767 = vmatprep.subr.mxu0 0.0
    %768 = vmatpush1.msra.mxu0 0.0
    %769 = vmatprep.subr.mxu0 0.0
    %770 = vmatpush1.msra.mxu0 0.0
    %771 = vmatprep.subr.mxu0 0.0
    %772 = vmatpush1.msra.mxu0 0.0
    %773 = vmatprep.subr.mxu0 0.0
    %774 = vmatpush1.msra.mxu0 0.0
    %775 = vmatprep.subr.mxu0 0.0
    %776 = vmatpush1.msra.mxu0 0.0
    %777 = vmatprep.subr.mxu0 0.0
    %778 = vmatpush1.msra.mxu0 0.0
    %779 = vmatprep.subr.mxu0 0.0
    %780 = vmatpush1.msra.mxu0 %v746
    %781 = vmatprep.subr.mxu0 0.0
    %782 = vmatpush1.msra.mxu0 %v745
    %783 = vmatprep.subr.mxu0 0.0
    %784 = vmatpush1.msra.mxu0 %v744
    %785 = vmatprep.subr.mxu0 0.0
    %786 = vmatpush1.msra.mxu0 %v743
    %787 = vmatprep.subr.mxu0 0.0
    %788 = vmatpush2.msra.mxu0 0.0
    %789 = vmatprep.subr.mxu0 0.0
    %790 = vmatpush2.msra.mxu0 0.0
    %791 = vmatprep.subr.mxu0 0.0
    %792 = vmatpush2.msra.mxu0 0.0
    %793 = vmatprep.subr.mxu0 0.0
    %794 = vmatpush2.msra.mxu0 0.0
    %795 = vmatprep.subr.mxu0 0.0
    %796 = vmatpush2.msra.mxu0 0.0
    %797 = vmatprep.subr.mxu0 0.0
    %798 = vmatpush2.msra.mxu0 0.0
    %799 = vmatprep.subr.mxu0 0.0
    %800 = vmatpush2.msra.mxu0 0.0
    %801 = vmatprep.subr.mxu0 0.0
    %802 = vmatpush2.msra.mxu0 0.0
    %803 = vmatprep.subr.mxu0 0.0
    %804 = vmatpush2.msra.mxu0 0.0
    %805 = vmatprep.subr.mxu0 0.0
    %806 = vmatpush2.msra.mxu0 0.0
    %807 = vmatprep.subr.mxu0 0.0
    %808 = vmatpush2.msra.mxu0 0.0
    %809 = vmatprep.subr.mxu0 0.0
    %810 = vmatpush2.msra.mxu0 0.0
    %811 = vmatprep.subr.mxu0 0.0
    %812 = vmatpush2.msra.mxu0 0.0
    %813 = vmatprep.subr.mxu0 0.0
    %814 = vmatpush2.msra.mxu0 0.0
    %815 = vmatprep.subr.mxu0 0.0
    %816 = vmatpush2.msra.mxu0 0.0
    %817 = vmatprep.subr.mxu0 0.0
    %818 = vmatpush2.msra.mxu0 0.0
    %819 = vmatprep.mubr.f32.mxu0 0.0
    %820 = vmatmul.mubr.f32.gmra.mxu0 %v753
    %v821 = vpop.f32.mrf.mxu0
    %v822 = vadd.f32 %v751, %v821
    %v823 = vpop.f32.mrf.mxu0
    %824 = vdwg.mxu0
    %825 = vst [vmem:[#allocation8] sm:$0xff] %v822
    // Predicated region
    $region26: #{tpu_custom_call.1} parent=1 // pred_check
      _
    $region27: #{tpu_custom_call.1} parent=1 // pred_check_branch
      %827 = sbr.rel (0) target = $region29
    $region28: #{tpu_custom_call.1} parent=1 // pred_region
      %s829 = ssub.s32 128, 128
      %830 = vsyncadd [#allocation4], %s829
      %s832 = sshll.u32 [#allocation8], 4
      %s833 = int_to_ptr.vmem [resolvable:$true] %s832
      %835 = dma.vmem_to_hbm [thread:$0]  %s833, 128, %s3, [#allocation4]
    $region29: #{tpu_custom_call.1} parent=1 // pred_fallthru
      _
    // Predicated region
    $region30: #{tpu_custom_call.1} parent=1 // pred_check
      _
    $region31: #{tpu_custom_call.1} parent=1 // pred_check_branch
      %837 = sbr.rel (0) target = $region33
    $region32: #{tpu_custom_call.1} parent=1 // pred_region
      %838 = dma.done [#allocation4], 128
    $region33: #{tpu_custom_call.1} parent=1 // pred_fallthru
      _
    %839 = vsyncpa [#allocation3], 1
    %840 = vsyncpa [#allocation6], 1
    %841 = vsyncpa [#allocation4], 1

</llo_original>
